<compile_context>
chip_gen: v7x
topology: tpu7x:2x2x1
jax: 0.10.0
libtpu: 0.0.40
codegen_flags: <defaults>
</compile_context>

<pallas_src>
import jax
import jax.numpy as jnp
import numpy as np
from jax import lax
from jax.experimental import pallas as pl
from jax.experimental.pallas import tpu as pltpu


def _round_up(x, m):
    return (x + m - 1) // m * m


def kan_linear_forward(x, grid, coef, scale_base, scale_sp, k, neuron_fun='sum',
                       block_b=256, block_n=512, matmul_dtype=jnp.bfloat16):
    """Fused Pallas KANLinear forward.

    x          : (N, in_dim)
    grid       : (in_dim, G + 2k + 1)   extended knots
    coef       : (in_dim, out_dim, G + k)
    scale_base : (in_dim, out_dim)
    scale_sp   : (in_dim, out_dim)
    """
    n, in_dim = x.shape
    in_dim_g, n_knots = grid.shape
    in_dim_c, out_dim, n_basis = coef.shape
    assert in_dim_g == in_dim and in_dim_c == in_dim
    assert k >= 1, "spline order k >= 1 required"
    assert n_basis == n_knots - 1 - k
    if neuron_fun not in ('sum', 'mean'):
        # TODO(synk): neuron_fun=None (no reduction over in_dim, 3-D output) not implemented.
        raise NotImplementedError("only neuron_fun in {'sum','mean'} is supported")

    out_dtype = x.dtype
    nm1 = n_knots - 1                      # order-0 intervals per input feature
    c = in_dim * nm1                       # live lanes per sample
    cp = _round_up(c, 128)                 # lane-dense padded feature width

    out_pad = _round_up(out_dim, 128)      # dense (unmasked) output stores
    block_n = min(block_n, out_pad)
    block_n = _round_up(block_n, 128)
    while out_pad % block_n:               # ensure the out tiling divides evenly
        block_n -= 128

    block_b = max(8, min(block_b, _round_up(n, 8)))
    block_b = _round_up(block_b, 8)
    n_pad = _round_up(n, block_b)

    g = grid.astype(jnp.float32)

    def _flat(a):
        # (in_dim, width<=nm1) -> zero-pad each feature block to nm1 -> (cp,)
        a = jnp.pad(a, ((0, 0), (0, nm1 - a.shape[1])))
        return jnp.pad(a.reshape(c), (0, cp - c))

    # Knot tables (x-independent): hoists Cox-de Boor divides out of the kernel.
    # NOTE: degenerate/duplicate knots still yield inf/nan (same as the reference).
    rows = [_flat(g[:, :-1]), _flat(g[:, 1:])]
    for p in range(1, k + 1):
        wp = n_knots - 1 - p
        rows += [
            _flat(g[:, :wp]),                           # a_p = grid[:, t]
            _flat(g[:, p + 1:]),                        # b_p = grid[:, t+p+1]
            _flat(1.0 / (g[:, p:-1] - g[:, :wp])),      # 1 / (grid[t+p]   - grid[t])
            _flat(1.0 / (g[:, p + 1:] - g[:, 1:-p])),   # 1 / (grid[t+p+1] - grid[t+1])
        ]
    tab = jnp.stack(rows, axis=0)                       # (2 + 4k, cp), f32

    # Fused spline weights: row j*nm1+t holds scale_sp[j,:]*coef[j,:,t] for t < G+k,
    # zeros elsewhere (those phi lanes are exactly zero anyway).
    w_sp = jnp.zeros((in_dim, nm1, out_dim), jnp.float32)
    w_sp = w_sp.at[:, :n_basis, :].set(
        scale_sp[:, None, :].astype(jnp.float32)
        * jnp.transpose(coef, (0, 2, 1)).astype(jnp.float32))
    w_base = scale_base.astype(jnp.float32)
    if neuron_fun == 'mean':
        w_sp = w_sp / in_dim
        w_base = w_base / in_dim
    w_sp = w_sp.reshape(c, out_dim)
    w_sp = jnp.pad(w_sp, ((0, cp - c), (0, out_pad - out_dim))).astype(matmul_dtype)
    w_base = jnp.pad(w_base, ((0, 0), (0, out_pad - out_dim))).astype(matmul_dtype)

    x_p = jnp.pad(x.astype(jnp.float32), ((0, n_pad - n), (0, 0)))

    def kernel(x_ref, tab_ref, wsp_ref, wb_ref, out_ref, phi_ref, sres_ref):
        # Build the (expensive) basis features once per batch tile; reuse across out tiles.
        @pl.when(pl.program_id(1) == 0)
        def _():
            xr = x_ref[...]                                        # (TB, in_dim), f32
            tab_v = tab_ref[...]                                   # (2+4k, cp),   f32

            # 0/1 lane-expansion matrix generated in-register: E[j, l] = (l in feature j's block).
            r_id = lax.broadcasted_iota(jnp.int32, (in_dim, cp), 0)
            l_id = lax.broadcasted_iota(jnp.int32, (in_dim, cp), 1)
            e = ((l_id >= r_id * nm1) & (l_id < (r_id + 1) * nm1)).astype(jnp.float32)

            # xe[:, j*nm1 + t] = x[:, j]   (MXU; ~exact since E is 0/1)
            xe = jnp.dot(xr, e, preferred_element_type=jnp.float32)

            # Order-0 bases: half-open knot-interval indicator (matches pykan B_batch).
            gl = tab_v[0:1, :]
            gr = tab_v[1:2, :]
            v = jnp.logical_and(xe >= gl, xe < gr).astype(jnp.float32)

            # Cox-de Boor recursion, vectorized over every (feature, interval) lane.
            # Reciprocal denominators are 0 in padding / out-of-order lanes, so the roll
            # wrap-around never contaminates live lanes.
            for p in range(1, k + 1):
                r = 2 + 4 * (p - 1)
                a = tab_v[r + 0:r + 1, :]
                b = tab_v[r + 1:r + 2, :]
                il = tab_v[r + 2:r + 3, :]
                ir = tab_v[r + 3:r + 4, :]
                v_next = pltpu.roll(v, shift=cp - 1, axis=1)       # v_next[l] = v[l+1]
                v = (xe - a) * il * v + (b - xe) * ir * v_next

            phi_ref[...] = v.astype(phi_ref.dtype)
            # Residual branch: silu only over the in_dim live lanes (not all Cp lanes).
            sres_ref[...] = (xr * (1.0 / (1.0 + jnp.exp(-xr)))).astype(sres_ref.dtype)

        acc = jnp.dot(phi_ref[...], wsp_ref[...], preferred_element_type=jnp.float32)
        acc = acc + jnp.dot(sres_ref[...], wb_ref[...], preferred_element_type=jnp.float32)
        out_ref[...] = acc.astype(out_ref.dtype)

    dt_size = jnp.dtype(matmul_dtype).itemsize
    out_size = jnp.dtype(out_dtype).itemsize

    # Explicit VMEM budget (double-buffered streamed operands + scratch + temporaries),
    # clamped to 64 MiB so it is valid on v5e/v6e/v7x alike.
    vmem_bytes = (2 * block_b * in_dim * 4                 # x tiles
                  + 2 * tab.shape[0] * cp * 4              # knot tables
                  + 2 * cp * block_n * dt_size             # W_spline tiles
                  + 2 * in_dim * block_n * dt_size         # W_base tiles
                  + 2 * block_b * block_n * out_size       # output tiles
                  + block_b * cp * dt_size                 # phi scratch
                  + block_b * in_dim * dt_size             # silu scratch
                  + in_dim * cp * 4                        # in-kernel E
                  + 4 * block_b * cp * 4)                  # recursion temporaries
    vmem_limit = int(min(max(int(vmem_bytes * 1.5), 32 * 1024 * 1024), 64 * 1024 * 1024))

    cost = pl.CostEstimate(
        flops=int(n_pad * (2 * cp * out_pad + 2 * in_dim * out_pad
                           + 2 * in_dim * cp + (7 * k + 5) * cp)),
        transcendentals=int(n_pad * in_dim),
        bytes_accessed=int(n_pad * in_dim * 4 + n_pad * out_pad * out_size
                           + cp * out_pad * dt_size + in_dim * out_pad * dt_size
                           + tab.shape[0] * cp * 4))

    y = pl.pallas_call(
        kernel,
        out_shape=jax.ShapeDtypeStruct((n_pad, out_pad), out_dtype),
        grid_spec=pltpu.PrefetchScalarGridSpec(
            num_scalar_prefetch=0,
            grid=(n_pad // block_b, out_pad // block_n),
            in_specs=[
                pl.BlockSpec((block_b, in_dim), lambda i, j: (i, 0)),   # streamed x
                pl.BlockSpec(tab.shape, lambda i, j: (0, 0)),           # stationary tables
                pl.BlockSpec((cp, block_n), lambda i, j: (0, j)),       # W_spline column tiles
                pl.BlockSpec((in_dim, block_n), lambda i, j: (0, j)),   # W_base column tiles
            ],
            out_specs=pl.BlockSpec((block_b, block_n), lambda i, j: (i, j)),
            scratch_shapes=[
                pltpu.VMEM((block_b, cp), matmul_dtype),      # phi, reused across out tiles
                pltpu.VMEM((block_b, in_dim), matmul_dtype),  # silu(x)
            ],
        ),
        compiler_params=pltpu.CompilerParams(
            dimension_semantics=("parallel", "arbitrary"),
            vmem_limit_bytes=vmem_limit),
        cost_estimate=cost,
    )(x_p, tab, w_sp, w_base)

    if n_pad == n and out_pad == out_dim:
        return y
    return y[:n, :out_dim]


# ---------------------------------------------------------------------------
# Pure-JAX reference (mirrors pykan B_batch / coef2curve and the torch forward)
# ---------------------------------------------------------------------------
def _b_batch_ref(x, grid, k):
    x = x[:, :, None]
    grid = grid[None, :, :]
    value = jnp.logical_and(x >= grid[:, :, :-1], x < grid[:, :, 1:]).astype(jnp.float32)
    for p in range(1, k + 1):
        value = ((x - grid[:, :, :-(p + 1)]) / (grid[:, :, p:-1] - grid[:, :, :-(p + 1)]) * value[:, :, :-1]
                 + (grid[:, :, p + 1:] - x) / (grid[:, :, p + 1:] - grid[:, :, 1:-p]) * value[:, :, 1:])
    return value                                               # (N, in_dim, G + k)


def kan_linear_ref(x, grid, coef, scale_base, scale_sp, k, neuron_fun='sum'):
    bases = _b_batch_ref(x, grid, k)
    y = jnp.einsum('ijt,jlt->ijl', bases, coef)                # (N, in_dim, out_dim)
    base = jax.nn.silu(x)
    y = scale_base[None, :, :] * base[:, :, None] + scale_sp[None, :, :] * y
    if neuron_fun == 'sum':
        y = jnp.sum(y, axis=1)
    elif neuron_fun == 'mean':
        y = jnp.mean(y, axis=1)
    return y


def _make_params(key, in_dim, out_dim, num, k, noise_scale=0.5,
                 scale_base_mu=0.0, scale_base_sigma=1.0, scale_sp_val=1.0):
    # grid = extend_grid(linspace(-1, 1, num+1), k) == uniform knots on [-1-k*h, 1+k*h]
    k1, k2 = jax.random.split(key)
    h = 2.0 / num
    knots = jnp.linspace(-1.0 - k * h, 1.0 + k * h, num + 1 + 2 * k)
    grid = jnp.broadcast_to(knots, (in_dim, num + 1 + 2 * k)).astype(jnp.float32)
    # Deterministic synthetic parameter init (shapes/scales match the torch module).
    # NOTE: curve2coef's least-squares fit of init noise is replaced by a deterministic
    # random init of the same shape/scale (synthetic weights; forward math unchanged).
    n_basis = num + k
    coef = ((jax.random.uniform(k1, (in_dim, out_dim, n_basis)) - 0.5)
            * noise_scale / num).astype(jnp.float32)
    scale_base = (scale_base_mu / np.sqrt(in_dim)
                  + scale_base_sigma * (jax.random.uniform(k2, (in_dim, out_dim)) * 2.0 - 1.0)
                  / np.sqrt(in_dim)).astype(jnp.float32)
    scale_sp = (jnp.ones((in_dim, out_dim)) * scale_sp_val / np.sqrt(in_dim)).astype(jnp.float32)
    return grid, coef, scale_base, scale_sp


if __name__ == "__main__":
    key = jax.random.PRNGKey(0)
    k1, k2, k3, k4 = jax.random.split(key, 4)

    # Tolerances are deliberately conservative: they cover the MXU's bf16 pass
    # decomposition of f32 operands while still catching structural bugs (wrong lane
    # mapping / recursion / scaling produce O(1) errors).
    # ---- Test 1: module-default-ish small shapes -------------------------------------
    in_dim, out_dim, num, kk, batch = 4, 8, 5, 3, 64
    grid, coef, sb, ssp = _make_params(k1, in_dim, out_dim, num, kk)
    x = jax.random.normal(k2, (batch, in_dim), dtype=jnp.float32) * 0.8
    for nf in ("sum", "mean"):
        y_ref = kan_linear_ref(x, grid, coef, sb, ssp, kk, neuron_fun=nf)

        y32 = kan_linear_forward(x, grid, coef, sb, ssp, kk, neuron_fun=nf,
                                 matmul_dtype=jnp.float32)
        y32 = jax.block_until_ready(y32)
        np.testing.assert_allclose(np.asarray(y32), np.asarray(y_ref), rtol=2e-2, atol=2e-2)

        y16 = kan_linear_forward(x, grid, coef, sb, ssp, kk, neuron_fun=nf)  # bf16 default
        y16 = jax.block_until_ready(y16)
        np.testing.assert_allclose(np.asarray(y16), np.asarray(y_ref), rtol=5e-2, atol=5e-2)

    # ---- Test 2: in_dim*(G+2k) an exact multiple of 128 (roll wrap-around coverage) --
    in_dim2, out_dim2, batch2 = 128, 16, 32        # 128 * 11 = 1408 lanes, no pad lanes
    grid2, coef2, sb2, ssp2 = _make_params(k3, in_dim2, out_dim2, num, kk)
    x2 = jax.random.normal(k4, (batch2, in_dim2), dtype=jnp.float32) * 0.8
    y_ref2 = kan_linear_ref(x2, grid2, coef2, sb2, ssp2, kk, neuron_fun='sum')
    y2 = kan_linear_forward(x2, grid2, coef2, sb2, ssp2, kk, neuron_fun='sum',
                            matmul_dtype=jnp.float32)
    y2 = jax.block_until_ready(y2)
    np.testing.assert_allclose(np.asarray(y2), np.asarray(y_ref2), rtol=3e-2, atol=3e-2)

    print("KERNEL_OK")
</pallas_src>

<mosaic_0001>
module attributes {stable_mosaic.version = 11 : i64} {
  func.func @kernel(%arg0: i32, %arg1: i32, %arg2: memref<64x4xf32, #tpu.memory_space<vmem>>, %arg3: memref<14x128xf32, #tpu.memory_space<vmem>>, %arg4: memref<128x128xf32, #tpu.memory_space<vmem>>, %arg5: memref<4x128xf32, #tpu.memory_space<vmem>>, %arg6: memref<64x128xf32, #tpu.memory_space<vmem>>, %arg7: memref<64x128xf32, #tpu.memory_space<vmem>>, %arg8: memref<64x4xf32, #tpu.memory_space<vmem>>) attributes {dimension_semantics = [#tpu.dimension_semantics<parallel>, #tpu.dimension_semantics<arbitrary>], iteration_bounds = array<i64: 1, 1>, scalar_prefetch = 0 : i64, scratch_operands = 2 : i64, tpu.core_type = #tpu.core_type<tc>, window_params = [{transform_indices = @transform_0, window_bounds = array<i64: 64, 4>}, {pipeline_mode = #tpu.pipeline_mode<synchronous>, transform_indices = @transform_1, window_bounds = array<i64: 14, 128>}, {transform_indices = @transform_2, window_bounds = array<i64: 128, 128>}, {transform_indices = @transform_3, window_bounds = array<i64: 4, 128>}, {transform_indices = @transform_4, window_bounds = array<i64: 64, 128>}]} {
    %c0_i32 = arith.constant 0 : i32
    %0 = arith.cmpi eq, %arg1, %c0_i32 : i32
    %1 = arith.extui %0 : i1 to i32
    %c0_i32_0 = arith.constant 0 : i32
    %2 = arith.cmpi ne, %1, %c0_i32_0 : i32
    scf.if %2 {
      %c0_11 = arith.constant 0 : index
      %c0_12 = arith.constant 0 : index
      %11 = vector.load %arg2[%c0_11, %c0_12] : memref<64x4xf32, #tpu.memory_space<vmem>>, vector<64x4xf32>
      %c0_13 = arith.constant 0 : index
      %c0_14 = arith.constant 0 : index
      %12 = vector.load %arg3[%c0_13, %c0_14] : memref<14x128xf32, #tpu.memory_space<vmem>>, vector<14x128xf32>
      %13 = tpu.iota {dimensions = array<i32: 0>} : vector<4x128xi32>
      %14 = tpu.iota {dimensions = array<i32: 1>} : vector<4x128xi32>
      %c11_i32 = arith.constant 11 : i32
      %15 = vector.broadcast %c11_i32 : i32 to vector<4x128xi32>
      %16 = arith.muli %13, %15 : vector<4x128xi32>
      %17 = arith.cmpi sge, %14, %16 : vector<4x128xi32>
      %c1_i32 = arith.constant 1 : i32
      %18 = vector.broadcast %c1_i32 : i32 to vector<4x128xi32>
      %19 = arith.addi %13, %18 : vector<4x128xi32>
      %c11_i32_15 = arith.constant 11 : i32
      %20 = vector.broadcast %c11_i32_15 : i32 to vector<4x128xi32>
      %21 = arith.muli %19, %20 : vector<4x128xi32>
      %22 = arith.cmpi slt, %14, %21 : vector<4x128xi32>
      %23 = arith.andi %17, %22 : vector<4x128xi1>
      %24 = arith.extui %23 : vector<4x128xi1> to vector<4x128xi32>
      %25 = arith.sitofp %24 : vector<4x128xi32> to vector<4x128xf32>
      %cst_16 = arith.constant dense<0.000000e+00> : vector<64x128xf32>
      %26 = tpu.matmul %11, %25, %cst_16 {dimension_numbers = #tpu.dot_dimension_numbers<[1], [0], [0], [1], [0, 0, 1, 1], [], []>} : vector<64x4xf32>, vector<4x128xf32>, vector<64x128xf32> -> vector<64x128xf32>
      %27 = vector.extract_strided_slice %12 {offsets = [0, 0], sizes = [1, 128], strides = [1, 1]} : vector<14x128xf32> to vector<1x128xf32>
      %28 = vector.extract_strided_slice %12 {offsets = [1, 0], sizes = [1, 128], strides = [1, 1]} : vector<14x128xf32> to vector<1x128xf32>
      %29 = vector.broadcast %27 : vector<1x128xf32> to vector<64x128xf32>
      %30 = arith.cmpf oge, %26, %29 : vector<64x128xf32>
      %31 = vector.broadcast %28 : vector<1x128xf32> to vector<64x128xf32>
      %32 = arith.cmpf olt, %26, %31 : vector<64x128xf32>
      %33 = arith.andi %30, %32 : vector<64x128xi1>
      %34 = arith.extui %33 : vector<64x128xi1> to vector<64x128xi32>
      %35 = arith.sitofp %34 : vector<64x128xi32> to vector<64x128xf32>
      %36 = vector.extract_strided_slice %12 {offsets = [2, 0], sizes = [1, 128], strides = [1, 1]} : vector<14x128xf32> to vector<1x128xf32>
      %37 = vector.extract_strided_slice %12 {offsets = [3, 0], sizes = [1, 128], strides = [1, 1]} : vector<14x128xf32> to vector<1x128xf32>
      %38 = vector.extract_strided_slice %12 {offsets = [4, 0], sizes = [1, 128], strides = [1, 1]} : vector<14x128xf32> to vector<1x128xf32>
      %39 = vector.extract_strided_slice %12 {offsets = [5, 0], sizes = [1, 128], strides = [1, 1]} : vector<14x128xf32> to vector<1x128xf32>
      %c127_i32 = arith.constant 127 : i32
      %40 = tpu.dynamic_rotate %35 by %c127_i32 dim 1 : vector<64x128xf32>, i32 -> vector<64x128xf32>
      %41 = vector.broadcast %36 : vector<1x128xf32> to vector<64x128xf32>
      %42 = arith.subf %26, %41 : vector<64x128xf32>
      %43 = vector.broadcast %38 : vector<1x128xf32> to vector<64x128xf32>
      %44 = arith.mulf %42, %43 : vector<64x128xf32>
      %45 = arith.mulf %44, %35 : vector<64x128xf32>
      %46 = vector.broadcast %37 : vector<1x128xf32> to vector<64x128xf32>
      %47 = arith.subf %46, %26 : vector<64x128xf32>
      %48 = vector.broadcast %39 : vector<1x128xf32> to vector<64x128xf32>
      %49 = arith.mulf %47, %48 : vector<64x128xf32>
      %50 = arith.mulf %49, %40 : vector<64x128xf32>
      %51 = arith.addf %45, %50 : vector<64x128xf32>
      %52 = vector.extract_strided_slice %12 {offsets = [6, 0], sizes = [1, 128], strides = [1, 1]} : vector<14x128xf32> to vector<1x128xf32>
      %53 = vector.extract_strided_slice %12 {offsets = [7, 0], sizes = [1, 128], strides = [1, 1]} : vector<14x128xf32> to vector<1x128xf32>
      %54 = vector.extract_strided_slice %12 {offsets = [8, 0], sizes = [1, 128], strides = [1, 1]} : vector<14x128xf32> to vector<1x128xf32>
      %55 = vector.extract_strided_slice %12 {offsets = [9, 0], sizes = [1, 128], strides = [1, 1]} : vector<14x128xf32> to vector<1x128xf32>
      %c127_i32_17 = arith.constant 127 : i32
      %56 = tpu.dynamic_rotate %51 by %c127_i32_17 dim 1 : vector<64x128xf32>, i32 -> vector<64x128xf32>
      %57 = vector.broadcast %52 : vector<1x128xf32> to vector<64x128xf32>
      %58 = arith.subf %26, %57 : vector<64x128xf32>
      %59 = vector.broadcast %54 : vector<1x128xf32> to vector<64x128xf32>
      %60 = arith.mulf %58, %59 : vector<64x128xf32>
      %61 = arith.mulf %60, %51 : vector<64x128xf32>
      %62 = vector.broadcast %53 : vector<1x128xf32> to vector<64x128xf32>
      %63 = arith.subf %62, %26 : vector<64x128xf32>
      %64 = vector.broadcast %55 : vector<1x128xf32> to vector<64x128xf32>
      %65 = arith.mulf %63, %64 : vector<64x128xf32>
      %66 = arith.mulf %65, %56 : vector<64x128xf32>
      %67 = arith.addf %61, %66 : vector<64x128xf32>
      %68 = vector.extract_strided_slice %12 {offsets = [10, 0], sizes = [1, 128], strides = [1, 1]} : vector<14x128xf32> to vector<1x128xf32>
      %69 = vector.extract_strided_slice %12 {offsets = [11, 0], sizes = [1, 128], strides = [1, 1]} : vector<14x128xf32> to vector<1x128xf32>
      %70 = vector.extract_strided_slice %12 {offsets = [12, 0], sizes = [1, 128], strides = [1, 1]} : vector<14x128xf32> to vector<1x128xf32>
      %71 = vector.extract_strided_slice %12 {offsets = [13, 0], sizes = [1, 128], strides = [1, 1]} : vector<14x128xf32> to vector<1x128xf32>
      %c127_i32_18 = arith.constant 127 : i32
      %72 = tpu.dynamic_rotate %67 by %c127_i32_18 dim 1 : vector<64x128xf32>, i32 -> vector<64x128xf32>
      %73 = vector.broadcast %68 : vector<1x128xf32> to vector<64x128xf32>
      %74 = arith.subf %26, %73 : vector<64x128xf32>
      %75 = vector.broadcast %70 : vector<1x128xf32> to vector<64x128xf32>
      %76 = arith.mulf %74, %75 : vector<64x128xf32>
      %77 = arith.mulf %76, %67 : vector<64x128xf32>
      %78 = vector.broadcast %69 : vector<1x128xf32> to vector<64x128xf32>
      %79 = arith.subf %78, %26 : vector<64x128xf32>
      %80 = vector.broadcast %71 : vector<1x128xf32> to vector<64x128xf32>
      %81 = arith.mulf %79, %80 : vector<64x128xf32>
      %82 = arith.mulf %81, %72 : vector<64x128xf32>
      %83 = arith.addf %77, %82 : vector<64x128xf32>
      %c0_19 = arith.constant 0 : index
      %c0_20 = arith.constant 0 : index
      %84 = vector.load %arg7[%c0_19, %c0_20] : memref<64x128xf32, #tpu.memory_space<vmem>>, vector<64x128xf32>
      tpu.vector_store %arg7[%c0_19, %c0_20], %83 {strides = array<i32>} : memref<64x128xf32, #tpu.memory_space<vmem>>, vector<64x128xf32>,
      %cst_21 = arith.constant 0.000000e+00 : f32
      %85 = vector.broadcast %cst_21 : f32 to vector<64x4xf32>
      %86 = arith.subf %85, %11 : vector<64x4xf32>
      %87 = math.exp %86 : vector<64x4xf32>
      %cst_22 = arith.constant 1.000000e+00 : f32
      %88 = vector.broadcast %cst_22 : f32 to vector<64x4xf32>
      %89 = arith.addf %88, %87 : vector<64x4xf32>
      %cst_23 = arith.constant 1.000000e+00 : f32
      %90 = vector.broadcast %cst_23 : f32 to vector<64x4xf32>
      %91 = arith.divf %90, %89 : vector<64x4xf32>
      %92 = arith.mulf %11, %91 : vector<64x4xf32>
      %c0_24 = arith.constant 0 : index
      %c0_25 = arith.constant 0 : index
      %93 = vector.load %arg8[%c0_24, %c0_25] : memref<64x4xf32, #tpu.memory_space<vmem>>, vector<64x4xf32>
      tpu.vector_store %arg8[%c0_24, %c0_25], %92 {strides = array<i32>} : memref<64x4xf32, #tpu.memory_space<vmem>>, vector<64x4xf32>,
    } else {
    }
    %c0 = arith.constant 0 : index
    %c0_1 = arith.constant 0 : index
    %3 = vector.load %arg7[%c0, %c0_1] : memref<64x128xf32, #tpu.memory_space<vmem>>, vector<64x128xf32>
    %c0_2 = arith.constant 0 : index
    %c0_3 = arith.constant 0 : index
    %4 = vector.load %arg4[%c0_2, %c0_3] : memref<128x128xf32, #tpu.memory_space<vmem>>, vector<128x128xf32>
    %cst = arith.constant dense<0.000000e+00> : vector<64x128xf32>
    %5 = tpu.matmul %3, %4, %cst {dimension_numbers = #tpu.dot_dimension_numbers<[1], [0], [0], [1], [0, 0, 1, 1], [], []>} : vector<64x128xf32>, vector<128x128xf32>, vector<64x128xf32> -> vector<64x128xf32>
    %c0_4 = arith.constant 0 : index
    %c0_5 = arith.constant 0 : index
    %6 = vector.load %arg8[%c0_4, %c0_5] : memref<64x4xf32, #tpu.memory_space<vmem>>, vector<64x4xf32>
    %c0_6 = arith.constant 0 : index
    %c0_7 = arith.constant 0 : index
    %7 = vector.load %arg5[%c0_6, %c0_7] : memref<4x128xf32, #tpu.memory_space<vmem>>, vector<4x128xf32>
    %cst_8 = arith.constant dense<0.000000e+00> : vector<64x128xf32>
    %8 = tpu.matmul %6, %7, %cst_8 {dimension_numbers = #tpu.dot_dimension_numbers<[1], [0], [0], [1], [0, 0, 1, 1], [], []>} : vector<64x4xf32>, vector<4x128xf32>, vector<64x128xf32> -> vector<64x128xf32>
    %9 = arith.addf %5, %8 : vector<64x128xf32>
    %c0_9 = arith.constant 0 : index
    %c0_10 = arith.constant 0 : index
    %10 = vector.load %arg6[%c0_9, %c0_10] : memref<64x128xf32, #tpu.memory_space<vmem>>, vector<64x128xf32>
    tpu.vector_store %arg6[%c0_9, %c0_10], %9 {strides = array<i32>} : memref<64x128xf32, #tpu.memory_space<vmem>>, vector<64x128xf32>,
    return
  }
  func.func @transform_0(%arg0: i32, %arg1: i32) -> (i32, i32) {
    %c0_i32 = arith.constant 0 : i32
    %c0_i32_0 = arith.constant 0 : i32
    return %arg0, %c0_i32 : i32, i32
  }
  func.func @transform_1(%arg0: i32, %arg1: i32) -> (i32, i32) {
    %c0_i32 = arith.constant 0 : i32
    %c0_i32_0 = arith.constant 0 : i32
    %c0_i32_1 = arith.constant 0 : i32
    return %c0_i32, %c0_i32_0 : i32, i32
  }
  func.func @transform_2(%arg0: i32, %arg1: i32) -> (i32, i32) {
    %c0_i32 = arith.constant 0 : i32
    %c0_i32_0 = arith.constant 0 : i32
    return %c0_i32, %arg1 : i32, i32
  }
  func.func @transform_3(%arg0: i32, %arg1: i32) -> (i32, i32) {
    %c0_i32 = arith.constant 0 : i32
    %c0_i32_0 = arith.constant 0 : i32
    return %c0_i32, %arg1 : i32, i32
  }
  func.func @transform_4(%arg0: i32, %arg1: i32) -> (i32, i32) {
    %c0_i32 = arith.constant 0 : i32
    return %arg0, %arg1 : i32, i32
  }
}

</mosaic_0001>

<llo_original>
// kernel: tpu_custom_call.1
$region0: #{tpu_custom_call.1}
  #allocation0 [shape = 'u32[]', space=smem, size = 0x4, offset = 0x4, fixed_abs, tag = 'smem constant byte address 0x4 - core index']
  #allocation1 [shape = 'u32[144,128]{1,0:T(1,128)}', space=vmem, size = 0x12000, scoped, tag = 'internal scratch']
  #allocation2 [shape = 'f32[64,128]{1,0:T(8,128)}', space=vmem, size = 0x8000, scoped, tag = 'scratch operand']
  #allocation3 [shape = 'f32[64,4]{1,0:T(8,128)}', space=vmem, size = 0x8000, scoped, tag = 'scratch operand']
  %s0 = inlined_call_operand.vmem [shape: f32[64,4], index: 0, kind: input, shape index: {}]
  %s1 = inlined_call_operand.vmem [shape: f32[14,128], index: 1, kind: input, shape index: {}]
  %s2 = inlined_call_operand.hbm [shape: f32[128,128], index: 2, kind: input, shape index: {}]
  %s3 = inlined_call_operand.vmem [shape: f32[4,128], index: 3, kind: input, shape index: {}]
  %s4 = inlined_call_operand.hbm [shape: f32[64,128], index: 4, kind: output, shape index: {}]
  %s5 = sld [smem:[#allocation0]]
  $region34: #{tpu_custom_call.1} parent=0
    _
  %s7 = ssub.s32 1, %s5
  %s8 = scalar_select 0, %s7, %s5
  $region1: #{tpu_custom_call.1} parent=0
    #allocation4 [shape = 'u8[65536]{0}', space=vmem, size = 0x10000, scoped, tag = 'input window, operand 2, single buffered']
    #allocation5 [shape = 's32[1]{0}', space=sflag, size = 0x4, scoped, tag = 'scoped memory for tpu_custom_call.1']
    #allocation6 [shape = 's32[1]{0}', space=sflag, size = 0x4, scoped, tag = 'scoped memory for tpu_custom_call.1']
    #allocation7 [shape = 'u8[32768]{0}', space=vmem, size = 0x8000, scoped, tag = 'output window, operand 0, single buffered']
    %9 = vsyncpa [#allocation5], 0
    %10 = vsyncpa [#allocation6], 0
    // Predicated region
    $region2: #{tpu_custom_call.1} parent=1 // pred_check
      _
    $region3: #{tpu_custom_call.1} parent=1 // pred_check_branch
      %12 = sbr.rel (0) target = $region5
    $region4: #{tpu_custom_call.1} parent=1 // pred_region
      _
    $region5: #{tpu_custom_call.1} parent=1 // pred_fallthru
      _
    // Predicated region
    $region6: #{tpu_custom_call.1} parent=1 // pred_check
      _
    $region7: #{tpu_custom_call.1} parent=1 // pred_check_branch
      %14 = sbr.rel (0) target = $region9
    $region8: #{tpu_custom_call.1} parent=1 // pred_region
      _
    $region9: #{tpu_custom_call.1} parent=1 // pred_fallthru
      _
    // Predicated region
    $region10: #{tpu_custom_call.1} parent=1 // pred_check
      _
    $region11: #{tpu_custom_call.1} parent=1 // pred_check_branch
      %16 = sbr.rel (0) target = $region13
    $region12: #{tpu_custom_call.1} parent=1 // pred_region
      %s18 = ssub.s32 2048, 2048
      %19 = vsyncadd [#allocation5], %s18
      %s20 = sshll.u32 [#allocation4], 4
      %s21 = int_to_ptr.vmem [resolvable:$true] %s20
      %26 = dma.hbm_to_vmem [thread:$0]  %s2, 2048, %s21, [#allocation5], 128, 128, 8
    $region13: #{tpu_custom_call.1} parent=1 // pred_fallthru
      _
    // Predicated region
    $region14: #{tpu_custom_call.1} parent=1 // pred_check
      _
    $region15: #{tpu_custom_call.1} parent=1 // pred_check_branch
      %28 = sbr.rel (0) target = $region17
    $region16: #{tpu_custom_call.1} parent=1 // pred_region
      _
    $region17: #{tpu_custom_call.1} parent=1 // pred_fallthru
      _
    // Predicated region
    $region18: #{tpu_custom_call.1} parent=1 // pred_check
      _
    $region19: #{tpu_custom_call.1} parent=1 // pred_check_branch
      %30 = sbr.rel (0) target = $region21
    $region20: #{tpu_custom_call.1} parent=1 // pred_region
      %31 = dma.done [#allocation5], 2048
    $region21: #{tpu_custom_call.1} parent=1 // pred_fallthru
      _
    %p32 = scmp.eq.s32.totalorder 0, 0
    // Predicated region
    $region22: #{tpu_custom_call.1} parent=1 // pred_check
      %p33 = pneg %p32
    $region23: #{tpu_custom_call.1} parent=1 // pred_check_branch
      %35 = sbr.rel (%p33) target = $region25
    $region24: #{tpu_custom_call.1} parent=1 // pred_region
      %v36 = vld [vmem:[%s0] sm:$0xff]
      %v37 = vld [vmem:[%s0 + $0x8] sm:$0xff]
      %v38 = vld [vmem:[%s0 + $0x10] sm:$0xff]
      %v39 = vld [vmem:[%s0 + $0x18] sm:$0xff]
      %v40 = vld [vmem:[%s0 + $0x20] sm:$0xff]
      %v41 = vld [vmem:[%s0 + $0x28] sm:$0xff]
      %v42 = vld [vmem:[%s0 + $0x30] sm:$0xff]
      %v43 = vld [vmem:[%s0 + $0x38] sm:$0xff]
      %v44 = vld [vmem:[%s1] sm:$0xff]
      %v45 = vld [vmem:[%s1 + $0x8] sm:$0x3f]
      %v46 = vlaneseq
      %v47 = vshrl.u32 %v46, 7
      %v48 = vlaneseq
      %v49 = vand.u32 %v48, 127
      %v50 = vmul.u32 %v47, 11
      %vm51 = vcmp.ge.s32.totalorder %v49, %v50
      %v52 = vadd.s32 %v47, 1
      %v53 = vmul.u32 %v52, 11
      %vm54 = vcmp.lt.s32.totalorder %v49, %v53
      %vm55 = vmand %vm51, %vm54
      %v56 = vsel %vm55, 1, 0
      %v57 = vcvt.s32.f32 %v56
      %vm58 = vcmask 31744
      %v60 = vsel %vm58, %v36, 0
      %v63 = vsel %vm58, %v37, 0
      %v66 = vsel %vm58, %v38, 0
      %v69 = vsel %vm58, %v39, 0
      %v72 = vsel %vm58, %v40, 0
      %v75 = vsel %vm58, %v41, 0
      %v78 = vsel %vm58, %v42, 0
      %v81 = vsel %vm58, %v43, 0
      %vm83 = vcmask 1043456
      %v85 = vsel %vm83, %v57, 0
      %87 = vmatprep.subr.mxu0 0.0
      %88 = vmatpush1.msra.mxu0 %v85
      %89 = vmatprep.subr.mxu0 0.0
      %90 = vmatpush1.msra.mxu0 0.0
      %91 = vmatprep.subr.mxu0 0.0
      %92 = vmatpush1.msra.mxu0 0.0
      %93 = vmatprep.subr.mxu0 0.0
      %94 = vmatpush1.msra.mxu0 0.0
      %95 = vmatprep.subr.mxu0 0.0
      %96 = vmatpush1.msra.mxu0 0.0
      %97 = vmatprep.subr.mxu0 0.0
      %98 = vmatpush1.msra.mxu0 0.0
      %99 = vmatprep.subr.mxu0 0.0
      %100 = vmatpush1.msra.mxu0 0.0
      %101 = vmatprep.subr.mxu0 0.0
      %102 = vmatpush1.msra.mxu0 0.0
      %103 = vmatprep.subr.mxu0 0.0
      %104 = vmatpush1.msra.mxu0 0.0
      %105 = vmatprep.subr.mxu0 0.0
      %106 = vmatpush1.msra.mxu0 0.0
      %107 = vmatprep.subr.mxu0 0.0
      %108 = vmatpush1.msra.mxu0 0.0
      %109 = vmatprep.subr.mxu0 0.0
      %110 = vmatpush1.msra.mxu0 0.0
      %111 = vmatprep.subr.mxu0 0.0
      %112 = vmatpush1.msra.mxu0 0.0
      %113 = vmatprep.subr.mxu0 0.0
      %114 = vmatpush1.msra.mxu0 0.0
      %115 = vmatprep.subr.mxu0 0.0
      %116 = vmatpush1.msra.mxu0 0.0
      %117 = vmatprep.subr.mxu0 0.0
      %118 = vmatpush1.msra.mxu0 0.0
      %119 = vmatprep.subr.mxu0 0.0
      %120 = vmatpush1.msra.mxu0 0.0
      %121 = vmatprep.subr.mxu0 0.0
      %122 = vmatpush1.msra.mxu0 0.0
      %123 = vmatprep.subr.mxu0 0.0
      %124 = vmatpush1.msra.mxu0 0.0
      %125 = vmatprep.subr.mxu0 0.0
      %126 = vmatpush1.msra.mxu0 0.0
      %127 = vmatprep.subr.mxu0 0.0
      %128 = vmatpush1.msra.mxu0 0.0
      %129 = vmatprep.subr.mxu0 0.0
      %130 = vmatpush1.msra.mxu0 0.0
      %131 = vmatprep.subr.mxu0 0.0
      %132 = vmatpush1.msra.mxu0 0.0
      %133 = vmatprep.subr.mxu0 0.0
      %134 = vmatpush1.msra.mxu0 0.0
      %135 = vmatprep.subr.mxu0 0.0
      %136 = vmatpush1.msra.mxu0 0.0
      %137 = vmatprep.subr.mxu0 0.0
      %138 = vmatpush1.msra.mxu0 0.0
      %139 = vmatprep.subr.mxu0 0.0
      %140 = vmatpush1.msra.mxu0 0.0
      %141 = vmatprep.subr.mxu0 0.0
      %142 = vmatpush1.msra.mxu0 0.0
      %143 = vmatprep.subr.mxu0 0.0
      %144 = vmatpush1.msra.mxu0 0.0
      %145 = vmatprep.subr.mxu0 0.0
      %146 = vmatpush1.msra.mxu0 0.0
      %147 = vmatprep.subr.mxu0 0.0
      %148 = vmatpush1.msra.mxu0 0.0
      %149 = vmatprep.subr.mxu0 0.0
      %150 = vmatpush1.msra.mxu0 0.0
      %151 = vmatprep.mubr.f32.mxu0 0.0
      %152 = vmatmul.mubr.f32.gmra.mrb[0].mxu0 %v60
      %v153 = vpop.f32.mrb[0].mxu0
      %v154 = vadd.f32 0.0, %v153
      %v155 = vpop.f32.mrb[0].mxu0
      %156 = vmatprep.mubr.f32.mxu0 0.0
      %157 = vmatmul.mubr.f32.gmra.mrb[0].mxu0 %v63
      %v158 = vpop.f32.mrb[0].mxu0
      %v159 = vadd.f32 0.0, %v158
      %v160 = vpop.f32.mrb[0].mxu0
      %161 = vmatprep.mubr.f32.mxu0 0.0
      %162 = vmatmul.mubr.f32.gmra.mrb[0].mxu0 %v66
      %v163 = vpop.f32.mrb[0].mxu0
      %v164 = vadd.f32 0.0, %v163
      %v165 = vpop.f32.mrb[0].mxu0
      %166 = vmatprep.mubr.f32.mxu0 0.0
      %167 = vmatmul.mubr.f32.gmra.mrb[0].mxu0 %v69
      %v168 = vpop.f32.mrb[0].mxu0
      %v169 = vadd.f32 0.0, %v168
      %v170 = vpop.f32.mrb[0].mxu0
      %171 = vmatprep.mubr.f32.mxu0 0.0
      %172 = vmatmul.mubr.f32.gmra.mrb[0].mxu0 %v72
      %v173 = vpop.f32.mrb[0].mxu0
      %v174 = vadd.f32 0.0, %v173
      %v175 = vpop.f32.mrb[0].mxu0
      %176 = vmatprep.mubr.f32.mxu0 0.0
      %177 = vmatmul.mubr.f32.gmra.mrb[0].mxu0 %v75
      %v178 = vpop.f32.mrb[0].mxu0
      %v179 = vadd.f32 0.0, %v178
      %v180 = vpop.f32.mrb[0].mxu0
      %181 = vmatprep.mubr.f32.mxu0 0.0
      %182 = vmatmul.mubr.f32.gmra.mrb[0].mxu0 %v78
      %v183 = vpop.f32.mrb[0].mxu0
      %v184 = vadd.f32 0.0, %v183
      %v185 = vpop.f32.mrb[0].mxu0
      %186 = vmatprep.mubr.f32.mxu0 0.0
      %187 = vmatmul.mubr.f32.gmra.mrb[0].mxu0 %v81
      %v188 = vpop.f32.mrb[0].mxu0
      %v189 = vadd.f32 0.0, %v188
      %v190 = vpop.f32.mrb[0].mxu0
      %191 = vdwg.mxu0
      %v192 = vlaneseq
      %v193 = vshrl.u32 %v192, 7
      %v194 = vsub.s32 0, %v193
      %v195 = vrot.slane %v44, %v194
      %vm196 = vcmp.ge.f32.partialorder %v154, %v195
      %vm197 = vcmp.ge.f32.partialorder %v159, %v195
      %vm198 = vcmp.ge.f32.partialorder %v164, %v195
      %vm199 = vcmp.ge.f32.partialorder %v169, %v195
      %vm200 = vcmp.ge.f32.partialorder %v174, %v195
      %vm201 = vcmp.ge.f32.partialorder %v179, %v195
      %vm202 = vcmp.ge.f32.partialorder %v184, %v195
      %vm203 = vcmp.ge.f32.partialorder %v189, %v195
      %v204 = vlaneseq
      %v205 = vshrl.u32 %v204, 7
      %v206 = vsub.s32 1, %v205
      %v207 = vrot.slane %v44, %v206
      %vm208 = vcmp.lt.f32.partialorder %v154, %v207
      %vm209 = vcmp.lt.f32.partialorder %v159, %v207
      %vm210 = vcmp.lt.f32.partialorder %v164, %v207
      %vm211 = vcmp.lt.f32.partialorder %v169, %v207
      %vm212 = vcmp.lt.f32.partialorder %v174, %v207
      %vm213 = vcmp.lt.f32.partialorder %v179, %v207
      %vm214 = vcmp.lt.f32.partialorder %v184, %v207
      %vm215 = vcmp.lt.f32.partialorder %v189, %v207
      %vm216 = vmand %vm196, %vm208
      %vm217 = vmand %vm197, %vm209
      %vm218 = vmand %vm198, %vm210
      %vm219 = vmand %vm199, %vm211
      %vm220 = vmand %vm200, %vm212
      %vm221 = vmand %vm201, %vm213
      %vm222 = vmand %vm202, %vm214
      %vm223 = vmand %vm203, %vm215
      %v224 = vsel %vm216, 1, 0
      %v225 = vsel %vm217, 1, 0
      %v226 = vsel %vm218, 1, 0
      %v227 = vsel %vm219, 1, 0
      %v228 = vsel %vm220, 1, 0
      %v229 = vsel %vm221, 1, 0
      %v230 = vsel %vm222, 1, 0
      %v231 = vsel %vm223, 1, 0
      %v232 = vcvt.s32.f32 %v224
      %v233 = vcvt.s32.f32 %v225
      %v234 = vcvt.s32.f32 %v226
      %v235 = vcvt.s32.f32 %v227
      %v236 = vcvt.s32.f32 %v228
      %v237 = vcvt.s32.f32 %v229
      %v238 = vcvt.s32.f32 %v230
      %v239 = vcvt.s32.f32 %v231
      %240 = vrot.lane.b32.xlu0 %v232, 127
      %v241 = vpop.permute.xlu0 %240
      %242 = vrot.lane.b32.xlu0 %v233, 127
      %v243 = vpop.permute.xlu0 %242
      %244 = vrot.lane.b32.xlu0 %v234, 127
      %v245 = vpop.permute.xlu0 %244
      %246 = vrot.lane.b32.xlu0 %v235, 127
      %v247 = vpop.permute.xlu0 %246
      %248 = vrot.lane.b32.xlu0 %v236, 127
      %v249 = vpop.permute.xlu0 %248
      %250 = vrot.lane.b32.xlu0 %v237, 127
      %v251 = vpop.permute.xlu0 %250
      %252 = vrot.lane.b32.xlu0 %v238, 127
      %v253 = vpop.permute.xlu0 %252
      %254 = vrot.lane.b32.xlu0 %v239, 127
      %v255 = vpop.permute.xlu0 %254
      %v256 = vlaneseq
      %v257 = vshrl.u32 %v256, 7
      %v258 = vsub.s32 2, %v257
      %v259 = vrot.slane %v44, %v258
      %v260 = vsub.f32 %v154, %v259
      %v261 = vsub.f32 %v159, %v259
      %v262 = vsub.f32 %v164, %v259
      %v263 = vsub.f32 %v169, %v259
      %v264 = vsub.f32 %v174, %v259
      %v265 = vsub.f32 %v179, %v259
      %v266 = vsub.f32 %v184, %v259
      %v267 = vsub.f32 %v189, %v259
      %v268 = vlaneseq
      %v269 = vshrl.u32 %v268, 7
      %v270 = vsub.s32 4, %v269
      %v271 = vrot.slane %v44, %v270
      %v272 = vmul.f32 %v260, %v271
      %v273 = vmul.f32 %v261, %v271
      %v274 = vmul.f32 %v262, %v271
      %v275 = vmul.f32 %v263, %v271
      %v276 = vmul.f32 %v264, %v271
      %v277 = vmul.f32 %v265, %v271
      %v278 = vmul.f32 %v266, %v271
      %v279 = vmul.f32 %v267, %v271
      %v280 = vmul.f32 %v272, %v232
      %v281 = vmul.f32 %v273, %v233
      %v282 = vmul.f32 %v274, %v234
      %v283 = vmul.f32 %v275, %v235
      %v284 = vmul.f32 %v276, %v236
      %v285 = vmul.f32 %v277, %v237
      %v286 = vmul.f32 %v278, %v238
      %v287 = vmul.f32 %v279, %v239
      %v288 = vlaneseq
      %v289 = vshrl.u32 %v288, 7
      %v290 = vsub.s32 3, %v289
      %v291 = vrot.slane %v44, %v290
      %v292 = vsub.f32 %v291, %v154
      %v293 = vsub.f32 %v291, %v159
      %v294 = vsub.f32 %v291, %v164
      %v295 = vsub.f32 %v291, %v169
      %v296 = vsub.f32 %v291, %v174
      %v297 = vsub.f32 %v291, %v179
      %v298 = vsub.f32 %v291, %v184
      %v299 = vsub.f32 %v291, %v189
      %v300 = vlaneseq
      %v301 = vshrl.u32 %v300, 7
      %v302 = vsub.s32 5, %v301
      %v303 = vrot.slane %v44, %v302
      %v304 = vmul.f32 %v292, %v303
      %v305 = vmul.f32 %v293, %v303
      %v306 = vmul.f32 %v294, %v303
      %v307 = vmul.f32 %v295, %v303
      %v308 = vmul.f32 %v296, %v303
      %v309 = vmul.f32 %v297, %v303
      %v310 = vmul.f32 %v298, %v303
      %v311 = vmul.f32 %v299, %v303
      %v312 = vmul.f32 %v304, %v241
      %v313 = vmul.f32 %v305, %v243
      %v314 = vmul.f32 %v306, %v245
      %v315 = vmul.f32 %v307, %v247
      %v316 = vmul.f32 %v308, %v249
      %v317 = vmul.f32 %v309, %v251
      %v318 = vmul.f32 %v310, %v253
      %v319 = vmul.f32 %v311, %v255
      %v320 = vadd.f32 %v280, %v312
      %v321 = vadd.f32 %v281, %v313
      %v322 = vadd.f32 %v282, %v314
      %v323 = vadd.f32 %v283, %v315
      %v324 = vadd.f32 %v284, %v316
      %v325 = vadd.f32 %v285, %v317
      %v326 = vadd.f32 %v286, %v318
      %v327 = vadd.f32 %v287, %v319
      %328 = vrot.lane.b32.xlu0 %v320, 127
      %v329 = vpop.permute.xlu0 %328
      %330 = vrot.lane.b32.xlu0 %v321, 127
      %v331 = vpop.permute.xlu0 %330
      %332 = vrot.lane.b32.xlu0 %v322, 127
      %v333 = vpop.permute.xlu0 %332
      %334 = vrot.lane.b32.xlu0 %v323, 127
      %v335 = vpop.permute.xlu0 %334
      %336 = vrot.lane.b32.xlu0 %v324, 127
      %v337 = vpop.permute.xlu0 %336
      %338 = vrot.lane.b32.xlu0 %v325, 127
      %v339 = vpop.permute.xlu0 %338
      %340 = vrot.lane.b32.xlu0 %v326, 127
      %v341 = vpop.permute.xlu0 %340
      %342 = vrot.lane.b32.xlu0 %v327, 127
      %v343 = vpop.permute.xlu0 %342
      %v344 = vlaneseq
      %v345 = vshrl.u32 %v344, 7
      %v346 = vsub.s32 6, %v345
      %v347 = vrot.slane %v44, %v346
      %v348 = vsub.f32 %v154, %v347
      %v349 = vsub.f32 %v159, %v347
      %v350 = vsub.f32 %v164, %v347
      %v351 = vsub.f32 %v169, %v347
      %v352 = vsub.f32 %v174, %v347
      %v353 = vsub.f32 %v179, %v347
      %v354 = vsub.f32 %v184, %v347
      %v355 = vsub.f32 %v189, %v347
      %v356 = vlaneseq
      %v357 = vshrl.u32 %v356, 7
      %v358 = vsub.s32 0, %v357
      %v359 = vrot.slane %v45, %v358
      %v360 = vmul.f32 %v348, %v359
      %v361 = vmul.f32 %v349, %v359
      %v362 = vmul.f32 %v350, %v359
      %v363 = vmul.f32 %v351, %v359
      %v364 = vmul.f32 %v352, %v359
      %v365 = vmul.f32 %v353, %v359
      %v366 = vmul.f32 %v354, %v359
      %v367 = vmul.f32 %v355, %v359
      %v368 = vmul.f32 %v360, %v320
      %v369 = vmul.f32 %v361, %v321
      %v370 = vmul.f32 %v362, %v322
      %v371 = vmul.f32 %v363, %v323
      %v372 = vmul.f32 %v364, %v324
      %v373 = vmul.f32 %v365, %v325
      %v374 = vmul.f32 %v366, %v326
      %v375 = vmul.f32 %v367, %v327
      %v376 = vlaneseq
      %v377 = vshrl.u32 %v376, 7
      %v378 = vsub.s32 7, %v377
      %v379 = vrot.slane %v44, %v378
      %v380 = vsub.f32 %v379, %v154
      %v381 = vsub.f32 %v379, %v159
      %v382 = vsub.f32 %v379, %v164
      %v383 = vsub.f32 %v379, %v169
      %v384 = vsub.f32 %v379, %v174
      %v385 = vsub.f32 %v379, %v179
      %v386 = vsub.f32 %v379, %v184
      %v387 = vsub.f32 %v379, %v189
      %v388 = vlaneseq
      %v389 = vshrl.u32 %v388, 7
      %v390 = vsub.s32 1, %v389
      %v391 = vrot.slane %v45, %v390
      %v392 = vmul.f32 %v380, %v391
      %v393 = vmul.f32 %v381, %v391
      %v394 = vmul.f32 %v382, %v391
      %v395 = vmul.f32 %v383, %v391
      %v396 = vmul.f32 %v384, %v391
      %v397 = vmul.f32 %v385, %v391
      %v398 = vmul.f32 %v386, %v391
      %v399 = vmul.f32 %v387, %v391
      %v400 = vmul.f32 %v392, %v329
      %v401 = vmul.f32 %v393, %v331
      %v402 = vmul.f32 %v394, %v333
      %v403 = vmul.f32 %v395, %v335
      %v404 = vmul.f32 %v396, %v337
      %v405 = vmul.f32 %v397, %v339
      %v406 = vmul.f32 %v398, %v341
      %v407 = vmul.f32 %v399, %v343
      %v408 = vadd.f32 %v368, %v400
      %v409 = vadd.f32 %v369, %v401
      %v410 = vadd.f32 %v370, %v402
      %v411 = vadd.f32 %v371, %v403
      %v412 = vadd.f32 %v372, %v404
      %v413 = vadd.f32 %v373, %v405
      %v414 = vadd.f32 %v374, %v406
      %v415 = vadd.f32 %v375, %v407
      %416 = vrot.lane.b32.xlu0 %v408, 127
      %v417 = vpop.permute.xlu0 %416
      %418 = vrot.lane.b32.xlu0 %v409, 127
      %v419 = vpop.permute.xlu0 %418
      %420 = vrot.lane.b32.xlu0 %v410, 127
      %v421 = vpop.permute.xlu0 %420
      %422 = vrot.lane.b32.xlu0 %v411, 127
      %v423 = vpop.permute.xlu0 %422
      %424 = vrot.lane.b32.xlu0 %v412, 127
      %v425 = vpop.permute.xlu0 %424
      %426 = vrot.lane.b32.xlu0 %v413, 127
      %v427 = vpop.permute.xlu0 %426
      %428 = vrot.lane.b32.xlu0 %v414, 127
      %v429 = vpop.permute.xlu0 %428
      %430 = vrot.lane.b32.xlu0 %v415, 127
      %v431 = vpop.permute.xlu0 %430
      %v432 = vlaneseq
      %v433 = vshrl.u32 %v432, 7
      %v434 = vsub.s32 2, %v433
      %v435 = vrot.slane %v45, %v434
      %v436 = vsub.f32 %v154, %v435
      %v437 = vsub.f32 %v159, %v435
      %v438 = vsub.f32 %v164, %v435
      %v439 = vsub.f32 %v169, %v435
      %v440 = vsub.f32 %v174, %v435
      %v441 = vsub.f32 %v179, %v435
      %v442 = vsub.f32 %v184, %v435
      %v443 = vsub.f32 %v189, %v435
      %v444 = vlaneseq
      %v445 = vshrl.u32 %v444, 7
      %v446 = vsub.s32 4, %v445
      %v447 = vrot.slane %v45, %v446
      %v448 = vmul.f32 %v436, %v447
      %v449 = vmul.f32 %v437, %v447
      %v450 = vmul.f32 %v438, %v447
      %v451 = vmul.f32 %v439, %v447
      %v452 = vmul.f32 %v440, %v447
      %v453 = vmul.f32 %v441, %v447
      %v454 = vmul.f32 %v442, %v447
      %v455 = vmul.f32 %v443, %v447
      %v456 = vmul.f32 %v448, %v408
      %v457 = vmul.f32 %v449, %v409
      %v458 = vmul.f32 %v450, %v410
      %v459 = vmul.f32 %v451, %v411
      %v460 = vmul.f32 %v452, %v412
      %v461 = vmul.f32 %v453, %v413
      %v462 = vmul.f32 %v454, %v414
      %v463 = vmul.f32 %v455, %v415
      %v464 = vlaneseq
      %v465 = vshrl.u32 %v464, 7
      %v466 = vsub.s32 3, %v465
      %v467 = vrot.slane %v45, %v466
      %v468 = vsub.f32 %v467, %v154
      %v469 = vsub.f32 %v467, %v159
      %v470 = vsub.f32 %v467, %v164
      %v471 = vsub.f32 %v467, %v169
      %v472 = vsub.f32 %v467, %v174
      %v473 = vsub.f32 %v467, %v179
      %v474 = vsub.f32 %v467, %v184
      %v475 = vsub.f32 %v467, %v189
      %v476 = vlaneseq
      %v477 = vshrl.u32 %v476, 7
      %v478 = vsub.s32 5, %v477
      %v479 = vrot.slane %v45, %v478
      %v480 = vmul.f32 %v468, %v479
      %v481 = vmul.f32 %v469, %v479
      %v482 = vmul.f32 %v470, %v479
      %v483 = vmul.f32 %v471, %v479
      %v484 = vmul.f32 %v472, %v479
      %v485 = vmul.f32 %v473, %v479
      %v486 = vmul.f32 %v474, %v479
      %v487 = vmul.f32 %v475, %v479
      %v488 = vmul.f32 %v480, %v417
      %v489 = vmul.f32 %v481, %v419
      %v490 = vmul.f32 %v482, %v421
      %v491 = vmul.f32 %v483, %v423
      %v492 = vmul.f32 %v484, %v425
      %v493 = vmul.f32 %v485, %v427
      %v494 = vmul.f32 %v486, %v429
      %v495 = vmul.f32 %v487, %v431
      %v496 = vadd.f32 %v456, %v488
      %v497 = vadd.f32 %v457, %v489
      %v498 = vadd.f32 %v458, %v490
      %v499 = vadd.f32 %v459, %v491
      %v500 = vadd.f32 %v460, %v492
      %v501 = vadd.f32 %v461, %v493
      %v502 = vadd.f32 %v462, %v494
      %v503 = vadd.f32 %v463, %v495
      %504 = vst [vmem:[#allocation2] sm:$0xff] %v496
      %505 = vst [vmem:[#allocation2 + $0x8] sm:$0xff] %v497
      %506 = vst [vmem:[#allocation2 + $0x10] sm:$0xff] %v498
      %507 = vst [vmem:[#allocation2 + $0x18] sm:$0xff] %v499
      %508 = vst [vmem:[#allocation2 + $0x20] sm:$0xff] %v500
      %509 = vst [vmem:[#allocation2 + $0x28] sm:$0xff] %v501
      %510 = vst [vmem:[#allocation2 + $0x30] sm:$0xff] %v502
      %511 = vst [vmem:[#allocation2 + $0x38] sm:$0xff] %v503
      %v512 = vsub.f32 0.0, %v36
      %v513 = vsub.f32 0.0, %v37
      %v514 = vsub.f32 0.0, %v38
      %v515 = vsub.f32 0.0, %v39
      %v516 = vsub.f32 0.0, %v40
      %v517 = vsub.f32 0.0, %v41
      %v518 = vsub.f32 0.0, %v42
      %v519 = vsub.f32 0.0, %v43
      %v520 = vmul.f32 %v512, 1.442695
      %v521 = vpow.pop %v520
      %v522 = vmul.f32 %v513, 1.442695
      %v523 = vpow.pop %v522
      %v524 = vmul.f32 %v514, 1.442695
      %v525 = vpow.pop %v524
      %v526 = vmul.f32 %v515, 1.442695
      %v527 = vpow.pop %v526
      %v528 = vmul.f32 %v516, 1.442695
      %v529 = vpow.pop %v528
      %v530 = vmul.f32 %v517, 1.442695
      %v531 = vpow.pop %v530
      %v532 = vmul.f32 %v518, 1.442695
      %v533 = vpow.pop %v532
      %v534 = vmul.f32 %v519, 1.442695
      %v535 = vpow.pop %v534
      %v536 = vadd.f32 %v521, 1.0
      %v537 = vadd.f32 %v523, 1.0
      %v538 = vadd.f32 %v525, 1.0
      %v539 = vadd.f32 %v527, 1.0
      %v540 = vadd.f32 %v529, 1.0
      %v541 = vadd.f32 %v531, 1.0
      %v542 = vadd.f32 %v533, 1.0
      %v543 = vadd.f32 %v535, 1.0
      %v544 = vrcp.pop %v536
      %v545 = vmul.f32 1.0, %v544
      %v546 = vrcp.pop %v537
      %v547 = vmul.f32 1.0, %v546
      %v548 = vrcp.pop %v538
      %v549 = vmul.f32 1.0, %v548
      %v550 = vrcp.pop %v539
      %v551 = vmul.f32 1.0, %v550
      %v552 = vrcp.pop %v540
      %v553 = vmul.f32 1.0, %v552
      %v554 = vrcp.pop %v541
      %v555 = vmul.f32 1.0, %v554
      %v556 = vrcp.pop %v542
      %v557 = vmul.f32 1.0, %v556
      %v558 = vrcp.pop %v543
      %v559 = vmul.f32 1.0, %v558
      %v560 = vmul.f32 %v36, %v545
      %v561 = vmul.f32 %v37, %v547
      %v562 = vmul.f32 %v38, %v549
      %v563 = vmul.f32 %v39, %v551
      %v564 = vmul.f32 %v40, %v553
      %v565 = vmul.f32 %v41, %v555
      %v566 = vmul.f32 %v42, %v557
      %v567 = vmul.f32 %v43, %v559
      %568 = vst.msk [vmem:[#allocation3] sm:$0xff] %vm58, %v560
      %569 = vst.msk [vmem:[#allocation3 + $0x8] sm:$0xff] %vm58, %v561
      %570 = vst.msk [vmem:[#allocation3 + $0x10] sm:$0xff] %vm58, %v562
      %571 = vst.msk [vmem:[#allocation3 + $0x18] sm:$0xff] %vm58, %v563
      %572 = vst.msk [vmem:[#allocation3 + $0x20] sm:$0xff] %vm58, %v564
      %573 = vst.msk [vmem:[#allocation3 + $0x28] sm:$0xff] %vm58, %v565
      %574 = vst.msk [vmem:[#allocation3 + $0x30] sm:$0xff] %vm58, %v566
      %575 = vst.msk [vmem:[#allocation3 + $0x38] sm:$0xff] %vm58, %v567
    $region25: #{tpu_custom_call.1} parent=1 // pred_fallthru
      _
    %v576 = vld [vmem:[#allocation2] sm:$0xff]
    %v577 = vld [vmem:[#allocation2 + $0x8] sm:$0xff]
    %v578 = vld [vmem:[#allocation2 + $0x10] sm:$0xff]
    %v579 = vld [vmem:[#allocation2 + $0x18] sm:$0xff]
    %v580 = vld [vmem:[#allocation2 + $0x20] sm:$0xff]
    %v581 = vld [vmem:[#allocation2 + $0x28] sm:$0xff]
    %v582 = vld [vmem:[#allocation2 + $0x30] sm:$0xff]
    %v583 = vld [vmem:[#allocation2 + $0x38] sm:$0xff]
    %v584 = vld [vmem:[#allocation4] sm:$0xff]
    %v585 = vld [vmem:[#allocation4 + $0x8] sm:$0xff]
    %v586 = vld [vmem:[#allocation4 + $0x10] sm:$0xff]
    %v587 = vld [vmem:[#allocation4 + $0x18] sm:$0xff]
    %v588 = vld [vmem:[#allocation4 + $0x20] sm:$0xff]
    %v589 = vld [vmem:[#allocation4 + $0x28] sm:$0xff]
    %v590 = vld [vmem:[#allocation4 + $0x30] sm:$0xff]
    %v591 = vld [vmem:[#allocation4 + $0x38] sm:$0xff]
    %v592 = vld [vmem:[#allocation4 + $0x40] sm:$0xff]
    %v593 = vld [vmem:[#allocation4 + $0x48] sm:$0xff]
    %v594 = vld [vmem:[#allocation4 + $0x50] sm:$0xff]
    %v595 = vld [vmem:[#allocation4 + $0x58] sm:$0xff]
    %v596 = vld [vmem:[#allocation4 + $0x60] sm:$0xff]
    %v597 = vld [vmem:[#allocation4 + $0x68] sm:$0xff]
    %v598 = vld [vmem:[#allocation4 + $0x70] sm:$0xff]
    %v599 = vld [vmem:[#allocation4 + $0x78] sm:$0xff]
    %v600 = vld [vmem:[#allocation3] sm:$0xff]
    %v601 = vld [vmem:[#allocation3 + $0x8] sm:$0xff]
    %v602 = vld [vmem:[#allocation3 + $0x10] sm:$0xff]
    %v603 = vld [vmem:[#allocation3 + $0x18] sm:$0xff]
    %v604 = vld [vmem:[#allocation3 + $0x20] sm:$0xff]
    %v605 = vld [vmem:[#allocation3 + $0x28] sm:$0xff]
    %v606 = vld [vmem:[#allocation3 + $0x30] sm:$0xff]
    %v607 = vld [vmem:[#allocation3 + $0x38] sm:$0xff]
    %v608 = vld [vmem:[%s3] sm:$0xf]
    %vm609 = vcmask 31744
    %v611 = vsel %vm609, %v600, 0
    %v614 = vsel %vm609, %v601, 0
    %v617 = vsel %vm609, %v602, 0
    %v620 = vsel %vm609, %v603, 0
    %v623 = vsel %vm609, %v604, 0
    %v626 = vsel %vm609, %v605, 0
    %v629 = vsel %vm609, %v606, 0
    %v632 = vsel %vm609, %v607, 0
    %vm634 = vcmask 1043456
    %v636 = vsel %vm634, %v608, 0
    %638 = vmatprep.subr.mxu0 0.0
    %639 = vmatpush1.msra.mxu0 %v636
    %640 = vmatprep.subr.mxu0 0.0
    %641 = vmatpush1.msra.mxu0 0.0
    %642 = vmatprep.subr.mxu0 0.0
    %643 = vmatpush1.msra.mxu0 0.0
    %644 = vmatprep.subr.mxu0 0.0
    %645 = vmatpush1.msra.mxu0 0.0
    %646 = vmatprep.subr.mxu0 0.0
    %647 = vmatpush1.msra.mxu0 0.0
    %648 = vmatprep.subr.mxu0 0.0
    %649 = vmatpush1.msra.mxu0 0.0
    %650 = vmatprep.subr.mxu0 0.0
    %651 = vmatpush1.msra.mxu0 0.0
    %652 = vmatprep.subr.mxu0 0.0
    %653 = vmatpush1.msra.mxu0 0.0
    %654 = vmatprep.subr.mxu0 0.0
    %655 = vmatpush1.msra.mxu0 0.0
    %656 = vmatprep.subr.mxu0 0.0
    %657 = vmatpush1.msra.mxu0 0.0
    %658 = vmatprep.subr.mxu0 0.0
    %659 = vmatpush1.msra.mxu0 0.0
    %660 = vmatprep.subr.mxu0 0.0
    %661 = vmatpush1.msra.mxu0 0.0
    %662 = vmatprep.subr.mxu0 0.0
    %663 = vmatpush1.msra.mxu0 0.0
    %664 = vmatprep.subr.mxu0 0.0
    %665 = vmatpush1.msra.mxu0 0.0
    %666 = vmatprep.subr.mxu0 0.0
    %667 = vmatpush1.msra.mxu0 0.0
    %668 = vmatprep.subr.mxu0 0.0
    %669 = vmatpush1.msra.mxu0 0.0
    %670 = vmatprep.subr.mxu0 0.0
    %671 = vmatpush1.msra.mxu0 0.0
    %672 = vmatprep.subr.mxu0 0.0
    %673 = vmatpush1.msra.mxu0 0.0
    %674 = vmatprep.subr.mxu0 0.0
    %675 = vmatpush1.msra.mxu0 0.0
    %676 = vmatprep.subr.mxu0 0.0
    %677 = vmatpush1.msra.mxu0 0.0
    %678 = vmatprep.subr.mxu0 0.0
    %679 = vmatpush1.msra.mxu0 0.0
    %680 = vmatprep.subr.mxu0 0.0
    %681 = vmatpush1.msra.mxu0 0.0
    %682 = vmatprep.subr.mxu0 0.0
    %683 = vmatpush1.msra.mxu0 0.0
    %684 = vmatprep.subr.mxu0 0.0
    %685 = vmatpush1.msra.mxu0 0.0
    %686 = vmatprep.subr.mxu0 0.0
    %687 = vmatpush1.msra.mxu0 0.0
    %688 = vmatprep.subr.mxu0 0.0
    %689 = vmatpush1.msra.mxu0 0.0
    %690 = vmatprep.subr.mxu0 0.0
    %691 = vmatpush1.msra.mxu0 0.0
    %692 = vmatprep.subr.mxu0 0.0
    %693 = vmatpush1.msra.mxu0 0.0
    %694 = vmatprep.subr.mxu0 0.0
    %695 = vmatpush1.msra.mxu0 0.0
    %696 = vmatprep.subr.mxu0 0.0
    %697 = vmatpush1.msra.mxu0 0.0
    %698 = vmatprep.subr.mxu0 0.0
    %699 = vmatpush1.msra.mxu0 0.0
    %700 = vmatprep.subr.mxu0 0.0
    %701 = vmatpush1.msra.mxu0 0.0
    %702 = vmatprep.mubr.f32.mxu0 0.0
    %703 = vmatmul.mubr.f32.gmra.mrb[0].mxu0 %v611
    %v704 = vpop.f32.mrb[0].mxu0
    %v705 = vadd.f32 0.0, %v704
    %v706 = vpop.f32.mrb[0].mxu0
    %707 = vmatprep.mubr.f32.mxu0 0.0
    %708 = vmatmul.mubr.f32.gmra.mrb[0].mxu0 %v614
    %v709 = vpop.f32.mrb[0].mxu0
    %v710 = vadd.f32 0.0, %v709
    %v711 = vpop.f32.mrb[0].mxu0
    %712 = vmatprep.mubr.f32.mxu0 0.0
    %713 = vmatmul.mubr.f32.gmra.mrb[0].mxu0 %v617
    %v714 = vpop.f32.mrb[0].mxu0
    %v715 = vadd.f32 0.0, %v714
    %v716 = vpop.f32.mrb[0].mxu0
    %717 = vmatprep.mubr.f32.mxu0 0.0
    %718 = vmatmul.mubr.f32.gmra.mrb[0].mxu0 %v620
    %v719 = vpop.f32.mrb[0].mxu0
    %v720 = vadd.f32 0.0, %v719
    %v721 = vpop.f32.mrb[0].mxu0
    %722 = vmatprep.mubr.f32.mxu0 0.0
    %723 = vmatmul.mubr.f32.gmra.mrb[0].mxu0 %v623
    %v724 = vpop.f32.mrb[0].mxu0
    %v725 = vadd.f32 0.0, %v724
    %v726 = vpop.f32.mrb[0].mxu0
    %727 = vmatprep.mubr.f32.mxu0 0.0
    %728 = vmatmul.mubr.f32.gmra.mrb[0].mxu0 %v626
    %v729 = vpop.f32.mrb[0].mxu0
    %v730 = vadd.f32 0.0, %v729
    %v731 = vpop.f32.mrb[0].mxu0
    %732 = vmatprep.mubr.f32.mxu0 0.0
    %733 = vmatmul.mubr.f32.gmra.mrb[0].mxu0 %v629
    %v734 = vpop.f32.mrb[0].mxu0
    %v735 = vadd.f32 0.0, %v734
    %v736 = vpop.f32.mrb[0].mxu0
    %737 = vmatprep.mubr.f32.mxu0 0.0
    %738 = vmatmul.mubr.f32.gmra.mrb[0].mxu0 %v632
    %v739 = vpop.f32.mrb[0].mxu0
    %v740 = vadd.f32 0.0, %v739
    %v741 = vpop.f32.mrb[0].mxu0
    %742 = vdwg.mxu0
    %743 = vmatprep.subr.mxu0 0.0
    %744 = vmatpush1.msra.mxu0 %v584
    %745 = vmatprep.subr.mxu0 0.0
    %746 = vmatpush1.msra.mxu0 %v585
    %747 = vmatprep.subr.mxu0 0.0
    %748 = vmatpush1.msra.mxu0 %v586
    %749 = vmatprep.subr.mxu0 0.0
    %750 = vmatpush1.msra.mxu0 %v587
    %751 = vmatprep.subr.mxu0 0.0
    %752 = vmatpush1.msra.mxu0 %v588
    %753 = vmatprep.subr.mxu0 0.0
    %754 = vmatpush1.msra.mxu0 %v589
    %755 = vmatprep.subr.mxu0 0.0
    %756 = vmatpush1.msra.mxu0 %v590
    %757 = vmatprep.subr.mxu0 0.0
    %758 = vmatpush1.msra.mxu0 %v591
    %759 = vmatprep.subr.mxu0 0.0
    %760 = vmatpush1.msra.mxu0 %v592
    %761 = vmatprep.subr.mxu0 0.0
    %762 = vmatpush1.msra.mxu0 %v593
    %763 = vmatprep.subr.mxu0 0.0
    %764 = vmatpush1.msra.mxu0 %v594
    %765 = vmatprep.subr.mxu0 0.0
    %766 = vmatpush1.msra.mxu0 %v595
    %767 = vmatprep.subr.mxu0 0.0
    %768 = vmatpush1.msra.mxu0 %v596
    %769 = vmatprep.subr.mxu0 0.0
    %770 = vmatpush1.msra.mxu0 %v597
    %771 = vmatprep.subr.mxu0 0.0
    %772 = vmatpush1.msra.mxu0 %v598
    %773 = vmatprep.subr.mxu0 0.0
    %774 = vmatpush1.msra.mxu0 %v599
    %775 = vmatprep.subr.mxu0 0.0
    %776 = vmatpush1.msra.mxu0 0.0
    %777 = vmatprep.subr.mxu0 0.0
    %778 = vmatpush1.msra.mxu0 0.0
    %779 = vmatprep.subr.mxu0 0.0
    %780 = vmatpush1.msra.mxu0 0.0
    %781 = vmatprep.subr.mxu0 0.0
    %782 = vmatpush1.msra.mxu0 0.0
    %783 = vmatprep.subr.mxu0 0.0
    %784 = vmatpush1.msra.mxu0 0.0
    %785 = vmatprep.subr.mxu0 0.0
    %786 = vmatpush1.msra.mxu0 0.0
    %787 = vmatprep.subr.mxu0 0.0
    %788 = vmatpush1.msra.mxu0 0.0
    %789 = vmatprep.subr.mxu0 0.0
    %790 = vmatpush1.msra.mxu0 0.0
    %791 = vmatprep.subr.mxu0 0.0
    %792 = vmatpush1.msra.mxu0 0.0
    %793 = vmatprep.subr.mxu0 0.0
    %794 = vmatpush1.msra.mxu0 0.0
    %795 = vmatprep.subr.mxu0 0.0
    %796 = vmatpush1.msra.mxu0 0.0
    %797 = vmatprep.subr.mxu0 0.0
    %798 = vmatpush1.msra.mxu0 0.0
    %799 = vmatprep.subr.mxu0 0.0
    %800 = vmatpush1.msra.mxu0 0.0
    %801 = vmatprep.subr.mxu0 0.0
    %802 = vmatpush1.msra.mxu0 0.0
    %803 = vmatprep.subr.mxu0 0.0
    %804 = vmatpush1.msra.mxu0 0.0
    %805 = vmatprep.subr.mxu0 0.0
    %806 = vmatpush1.msra.mxu0 0.0
    %807 = vmatprep.mubr.f32.mxu0 0.0
    %808 = vmatmul.mubr.f32.gmra.mrb[0].mxu0 %v576
    %v809 = vpop.f32.mrb[0].mxu0
    %v810 = vadd.f32 %v705, %v809
    %v811 = vpop.f32.mrb[0].mxu0
    %812 = vmatprep.mubr.f32.mxu0 0.0
    %813 = vmatmul.mubr.f32.gmra.mrb[0].mxu0 %v577
    %v814 = vpop.f32.mrb[0].mxu0
    %v815 = vadd.f32 %v710, %v814
    %v816 = vpop.f32.mrb[0].mxu0
    %817 = vmatprep.mubr.f32.mxu0 0.0
    %818 = vmatmul.mubr.f32.gmra.mrb[0].mxu0 %v578
    %v819 = vpop.f32.mrb[0].mxu0
    %v820 = vadd.f32 %v715, %v819
    %v821 = vpop.f32.mrb[0].mxu0
    %822 = vmatprep.mubr.f32.mxu0 0.0
    %823 = vmatmul.mubr.f32.gmra.mrb[0].mxu0 %v579
    %v824 = vpop.f32.mrb[0].mxu0
    %v825 = vadd.f32 %v720, %v824
    %v826 = vpop.f32.mrb[0].mxu0
    %827 = vmatprep.mubr.f32.mxu0 0.0
    %828 = vmatmul.mubr.f32.gmra.mrb[0].mxu0 %v580
    %v829 = vpop.f32.mrb[0].mxu0
    %v830 = vadd.f32 %v725, %v829
    %v831 = vpop.f32.mrb[0].mxu0
    %832 = vmatprep.mubr.f32.mxu0 0.0
    %833 = vmatmul.mubr.f32.gmra.mrb[0].mxu0 %v581
    %v834 = vpop.f32.mrb[0].mxu0
    %v835 = vadd.f32 %v730, %v834
    %v836 = vpop.f32.mrb[0].mxu0
    %837 = vmatprep.mubr.f32.mxu0 0.0
    %838 = vmatmul.mubr.f32.gmra.mrb[0].mxu0 %v582
    %v839 = vpop.f32.mrb[0].mxu0
    %v840 = vadd.f32 %v735, %v839
    %v841 = vpop.f32.mrb[0].mxu0
    %842 = vmatprep.mubr.f32.mxu0 0.0
    %843 = vmatmul.mubr.f32.gmra.mrb[0].mxu0 %v583
    %v844 = vpop.f32.mrb[0].mxu0
    %v845 = vadd.f32 %v740, %v844
    %v846 = vpop.f32.mrb[0].mxu0
    %847 = vdwg.mxu0
    %848 = vst [vmem:[#allocation7] sm:$0xff] %v810
    %849 = vst [vmem:[#allocation7 + $0x8] sm:$0xff] %v815
    %850 = vst [vmem:[#allocation7 + $0x10] sm:$0xff] %v820
    %851 = vst [vmem:[#allocation7 + $0x18] sm:$0xff] %v825
    %852 = vst [vmem:[#allocation7 + $0x20] sm:$0xff] %v830
    %853 = vst [vmem:[#allocation7 + $0x28] sm:$0xff] %v835
    %854 = vst [vmem:[#allocation7 + $0x30] sm:$0xff] %v840
    %855 = vst [vmem:[#allocation7 + $0x38] sm:$0xff] %v845
    // Predicated region
    $region26: #{tpu_custom_call.1} parent=1 // pred_check
      _
    $region27: #{tpu_custom_call.1} parent=1 // pred_check_branch
      %857 = sbr.rel (0) target = $region29
    $region28: #{tpu_custom_call.1} parent=1 // pred_region
      %s859 = ssub.s32 1024, 1024
      %860 = vsyncadd [#allocation6], %s859
      %s861 = sshll.u32 [#allocation7], 4
      %s862 = int_to_ptr.vmem [resolvable:$true] %s861
      %867 = dma.vmem_to_hbm [thread:$0]  %s862, 1024, %s4, [#allocation6], 128, 128, 8
    $region29: #{tpu_custom_call.1} parent=1 // pred_fallthru
      _
    // Predicated region
    $region30: #{tpu_custom_call.1} parent=1 // pred_check
      _
    $region31: #{tpu_custom_call.1} parent=1 // pred_check_branch
      %869 = sbr.rel (0) target = $region33
    $region32: #{tpu_custom_call.1} parent=1 // pred_region
      %870 = dma.done [#allocation6], 1024
    $region33: #{tpu_custom_call.1} parent=1 // pred_fallthru
      _
    %871 = vsyncpa [#allocation5], 1
    %872 = vsyncpa [#allocation6], 1

</llo_original>
